<compile_context>
chip_gen: v7x
topology: tpu7x:2x2x1
jax: 0.10.0
libtpu: 0.0.40
codegen_flags: <defaults>
</compile_context>

<pallas_src>
import jax
import jax.numpy as jnp
from jax.experimental import pallas as pl
from jax.experimental.pallas import tpu as pltpu


def _affine_kernel(x_ref, w_ref, b_ref, o_ref):
    """One batch tile of the folded module: (tb, K) @ (K, N) GEMM + bias, single store.

    x_ref: (tb, qp)    flattened images (zero-padded K lanes)
    w_ref: (qp, npad)  folded conv+linear weight, lane-dense columns
    b_ref: (1, npad)   folded bias
    o_ref: (tb, npad)
    """
    o_ref[...] = (
        jnp.dot(x_ref[...], w_ref[...], preferred_element_type=jnp.float32)
        + b_ref[...]
    ).astype(o_ref.dtype)


def _round_up(x, m):
    return (x + m - 1) // m * m


def cnn_mnist_2_forward(o_t, conv_w, conv_b, lin_w, lin_b):
    """o_t: (B, f, f); conv_w: (c_out, 1, 3, 3); conv_b: (c_out,);
    lin_w: (n, c_out*(f-2)^2) [PyTorch layout]; lin_b: (n,)  ->  (B, n)."""
    B, f, f2 = o_t.shape
    assert f == f2
    c_out = conv_w.shape[0]
    n = lin_w.shape[0]
    fo = f - 2
    assert lin_w.shape[1] == c_out * fo * fo
    q = f * f

    # ---- Host fold: Conv2d(1->c_out, 3x3, valid) + flatten + Linear  ==  one affine map.
    #   y[b,m] = lin_b[m] + sum_{c,i,j} lin_w4[m,c,i,j] * (conv_b[c]
    #            + sum_{di,dj} conv_w[c,0,di,dj] * x[b, i+di, j+dj])
    lin_w4 = lin_w.reshape(n, c_out, fo, fo).astype(jnp.float32)
    cw = conv_w.reshape(c_out, 3, 3).astype(jnp.float32)
    w_eff = jnp.zeros((f, f, n), jnp.float32)
    for di in range(3):                      # 9-iteration weight prep, done once on host
        for dj in range(3):
            contrib = jnp.einsum("c,ncij->ijn", cw[:, di, dj], lin_w4)
            w_eff = w_eff.at[di:di + fo, dj:dj + fo, :].add(contrib)
    w_eff = w_eff.reshape(q, n)
    b_eff = lin_b.astype(jnp.float32) + jnp.einsum(
        "c,ncij->n", conv_b.astype(jnp.float32), lin_w4)

    # ---- Lane/sublane-aligned zero padding (padded rows/cols contribute nothing).
    qp = _round_up(q, 128)      # GEMM K, lane-aligned
    npad = _round_up(n, 128)    # lane-dense output -> unmasked full-width stores

    # Batch tiling: fill the MXU M dimension, 8-row (f32 sublane) granularity,
    # ragged tails handled by zero padding + a final slice (never one giant block).
    Bp = _round_up(B, 8)
    tb = min(Bp, 256)
    grid_b = pl.cdiv(Bp, tb)
    Bpad = grid_b * tb

    x_flat = o_t.reshape(B, q).astype(jnp.float32)
    xp = jnp.zeros((Bpad, qp), jnp.float32).at[:B, :q].set(x_flat)
    wp = jnp.zeros((qp, npad), jnp.float32).at[:q, :n].set(w_eff)
    bp = jnp.zeros((1, npad), jnp.float32).at[0, :n].set(b_eff)

    out = pl.pallas_call(
        _affine_kernel,
        out_shape=jax.ShapeDtypeStruct((Bpad, npad), jnp.float32),
        grid=(grid_b,),
        in_specs=[
            pl.BlockSpec((tb, qp), lambda b: (b, 0)),        # images (streamed per tile)
            pl.BlockSpec((qp, npad), lambda b: (0, 0)),      # folded weight (resident)
            pl.BlockSpec((1, npad), lambda b: (0, 0)),       # folded bias
        ],
        out_specs=pl.BlockSpec((tb, npad), lambda b: (b, 0)),
        compiler_params=pltpu.CompilerParams(
            dimension_semantics=("parallel",),   # batch tiles are independent
        ),
    )(xp, wp, bp)

    return out[:B, :n]


if __name__ == "__main__":
    # Module config: f=16 (spatial), n=32, conv channels fixed at 8 by the module.
    f, n, c_out = 16, 32, 8
    fo = f - 2
    batch = 16  # fits in one (tb=16, 256) tile -> grid=(1,)

    key = jax.random.PRNGKey(0)
    k_x, k_cw, k_cb, k_lw, k_lb = jax.random.split(key, 5)

    # Deterministic init mimicking PyTorch defaults (uniform +-1/sqrt(fan_in)).
    cbound = 1.0 / (1 * 3 * 3) ** 0.5
    conv_w = jax.random.uniform(k_cw, (c_out, 1, 3, 3), jnp.float32, -cbound, cbound)
    conv_b = jax.random.uniform(k_cb, (c_out,), jnp.float32, -cbound, cbound)
    lbound = 1.0 / (c_out * fo * fo) ** 0.5
    lin_w = jax.random.uniform(k_lw, (n, c_out * fo * fo), jnp.float32, -lbound, lbound)
    lin_b = jax.random.uniform(k_lb, (n,), jnp.float32, -lbound, lbound)

    o_t = jax.random.normal(k_x, (batch, f, f), jnp.float32)

    out = cnn_mnist_2_forward(o_t, conv_w, conv_b, lin_w, lin_b)
    out = jax.block_until_ready(out)

    # Reference with PyTorch semantics: Conv2d(1,8,3) valid -> +bias -> flatten -> Linear.
    ref_conv = jax.lax.conv_general_dilated(
        o_t[:, None, :, :], conv_w, window_strides=(1, 1), padding="VALID",
        dimension_numbers=("NCHW", "OIHW", "NCHW"))
    ref_conv = ref_conv + conv_b[None, :, None, None]
    ref = ref_conv.reshape(batch, -1) @ lin_w.T + lin_b[None, :]

    assert out.shape == (batch, n)
    err = float(jnp.max(jnp.abs(out - ref)))
    assert jnp.allclose(out, ref, atol=1e-4, rtol=1e-4), err

    print("KERNEL_OK")
</pallas_src>

<mosaic_0001>
module attributes {stable_mosaic.version = 11 : i64} {
  func.func @_affine_kernel(%arg0: i32, %arg1: memref<16x256xf32, #tpu.memory_space<vmem>>, %arg2: memref<256x128xf32, #tpu.memory_space<vmem>>, %arg3: memref<1x128xf32, #tpu.memory_space<vmem>>, %arg4: memref<16x128xf32, #tpu.memory_space<vmem>>) attributes {dimension_semantics = [#tpu.dimension_semantics<parallel>], iteration_bounds = array<i64: 1>, scalar_prefetch = 0 : i64, scratch_operands = 0 : i64, tpu.core_type = #tpu.core_type<tc>, window_params = [{transform_indices = @transform_0, window_bounds = array<i64: 16, 256>}, {pipeline_mode = #tpu.pipeline_mode<synchronous>, transform_indices = @transform_1, window_bounds = array<i64: 256, 128>}, {pipeline_mode = #tpu.pipeline_mode<synchronous>, transform_indices = @transform_2, window_bounds = array<i64: 1, 128>}, {transform_indices = @transform_3, window_bounds = array<i64: 16, 128>}]} {
    %c0 = arith.constant 0 : index
    %c0_0 = arith.constant 0 : index
    %0 = vector.load %arg1[%c0, %c0_0] : memref<16x256xf32, #tpu.memory_space<vmem>>, vector<16x256xf32>
    %c0_1 = arith.constant 0 : index
    %c0_2 = arith.constant 0 : index
    %1 = vector.load %arg2[%c0_1, %c0_2] : memref<256x128xf32, #tpu.memory_space<vmem>>, vector<256x128xf32>
    %cst = arith.constant dense<0.000000e+00> : vector<16x128xf32>
    %2 = tpu.matmul %0, %1, %cst {dimension_numbers = #tpu.dot_dimension_numbers<[1], [0], [0], [1], [0, 0, 1, 1], [], []>} : vector<16x256xf32>, vector<256x128xf32>, vector<16x128xf32> -> vector<16x128xf32>
    %c0_3 = arith.constant 0 : index
    %c0_4 = arith.constant 0 : index
    %3 = vector.load %arg3[%c0_3, %c0_4] : memref<1x128xf32, #tpu.memory_space<vmem>>, vector<1x128xf32>
    %4 = vector.broadcast %3 : vector<1x128xf32> to vector<16x128xf32>
    %5 = arith.addf %2, %4 : vector<16x128xf32>
    %c0_5 = arith.constant 0 : index
    %c0_6 = arith.constant 0 : index
    %6 = vector.load %arg4[%c0_5, %c0_6] : memref<16x128xf32, #tpu.memory_space<vmem>>, vector<16x128xf32>
    tpu.vector_store %arg4[%c0_5, %c0_6], %5 {strides = array<i32>} : memref<16x128xf32, #tpu.memory_space<vmem>>, vector<16x128xf32>,
    return
  }
  func.func @transform_0(%arg0: i32) -> (i32, i32) {
    %c0_i32 = arith.constant 0 : i32
    %c0_i32_0 = arith.constant 0 : i32
    return %arg0, %c0_i32 : i32, i32
  }
  func.func @transform_1(%arg0: i32) -> (i32, i32) {
    %c0_i32 = arith.constant 0 : i32
    %c0_i32_0 = arith.constant 0 : i32
    %c0_i32_1 = arith.constant 0 : i32
    return %c0_i32, %c0_i32_0 : i32, i32
  }
  func.func @transform_2(%arg0: i32) -> (i32, i32) {
    %c0_i32 = arith.constant 0 : i32
    %c0_i32_0 = arith.constant 0 : i32
    %c0_i32_1 = arith.constant 0 : i32
    return %c0_i32, %c0_i32_0 : i32, i32
  }
  func.func @transform_3(%arg0: i32) -> (i32, i32) {
    %c0_i32 = arith.constant 0 : i32
    %c0_i32_0 = arith.constant 0 : i32
    return %arg0, %c0_i32 : i32, i32
  }
}

</mosaic_0001>

<llo_original>
// kernel: tpu_custom_call.1
$region0: #{tpu_custom_call.1}
  #allocation0 [shape = 'u32[]', space=smem, size = 0x4, offset = 0x4, fixed_abs, tag = 'smem constant byte address 0x4 - core index']
  #allocation1 [shape = 'u32[144,128]{1,0:T(1,128)}', space=vmem, size = 0x12000, scoped, tag = 'internal scratch']
  %s0 = inlined_call_operand.hbm [shape: f32[16,256], index: 0, kind: input, shape index: {}]
  %s1 = inlined_call_operand.hbm [shape: f32[256,128], index: 1, kind: input, shape index: {}]
  %s2 = inlined_call_operand.vmem [shape: f32[1,128], index: 2, kind: input, shape index: {}]
  %s3 = inlined_call_operand.hbm [shape: f32[16,128], index: 3, kind: output, shape index: {}]
  %s4 = sld [smem:[#allocation0]]
  $region30: #{tpu_custom_call.1} parent=0
    _
  %s6 = ssub.s32 1, %s4
  %s7 = scalar_select 0, %s6, %s4
  $region1: #{tpu_custom_call.1} parent=0
    #allocation2 [shape = 'u8[16384]{0}', space=vmem, size = 0x4000, scoped, tag = 'input window, operand 0, single buffered']
    #allocation3 [shape = 's32[1]{0}', space=sflag, size = 0x4, scoped, tag = 'scoped memory for tpu_custom_call.1']
    #allocation4 [shape = 's32[1]{0}', space=sflag, size = 0x4, scoped, tag = 'scoped memory for tpu_custom_call.1']
    #allocation5 [shape = 'u8[131072]{0}', space=vmem, size = 0x20000, scoped, tag = 'input window, operand 1, single buffered']
    #allocation6 [shape = 's32[1]{0}', space=sflag, size = 0x4, scoped, tag = 'scoped memory for tpu_custom_call.1']
    #allocation7 [shape = 'u8[8192]{0}', space=vmem, size = 0x2000, scoped, tag = 'output window, operand 0, single buffered']
    %8 = vsyncpa [#allocation3], 0
    %9 = vsyncpa [#allocation6], 0
    %10 = vsyncpa [#allocation4], 0
    // Predicated region
    $region2: #{tpu_custom_call.1} parent=1 // pred_check
      _
    $region3: #{tpu_custom_call.1} parent=1 // pred_check_branch
      %12 = sbr.rel (0) target = $region5
    $region4: #{tpu_custom_call.1} parent=1 // pred_region
      %s14 = ssub.s32 512, 512
      %15 = vsyncadd [#allocation3], %s14
      %s16 = sshll.u32 [#allocation2], 4
      %s17 = int_to_ptr.vmem [resolvable:$true] %s16
      %22 = dma.hbm_to_vmem [thread:$0]  %s0, 512, %s17, [#allocation3], 256, 256, 16
    $region5: #{tpu_custom_call.1} parent=1 // pred_fallthru
      _
    // Predicated region
    $region6: #{tpu_custom_call.1} parent=1 // pred_check
      _
    $region7: #{tpu_custom_call.1} parent=1 // pred_check_branch
      %24 = sbr.rel (0) target = $region9
    $region8: #{tpu_custom_call.1} parent=1 // pred_region
      %s26 = ssub.s32 4096, 4096
      %27 = vsyncadd [#allocation6], %s26
      %s28 = sshll.u32 [#allocation5], 4
      %s29 = int_to_ptr.vmem [resolvable:$true] %s28
      %34 = dma.hbm_to_vmem [thread:$0]  %s1, 4096, %s29, [#allocation6], 128, 128, 8
    $region9: #{tpu_custom_call.1} parent=1 // pred_fallthru
      _
    // Predicated region
    $region10: #{tpu_custom_call.1} parent=1 // pred_check
      _
    $region11: #{tpu_custom_call.1} parent=1 // pred_check_branch
      %36 = sbr.rel (0) target = $region13
    $region12: #{tpu_custom_call.1} parent=1 // pred_region
      _
    $region13: #{tpu_custom_call.1} parent=1 // pred_fallthru
      _
    // Predicated region
    $region14: #{tpu_custom_call.1} parent=1 // pred_check
      _
    $region15: #{tpu_custom_call.1} parent=1 // pred_check_branch
      %38 = sbr.rel (0) target = $region17
    $region16: #{tpu_custom_call.1} parent=1 // pred_region
      %39 = dma.done [#allocation3], 512
    $region17: #{tpu_custom_call.1} parent=1 // pred_fallthru
      _
    // Predicated region
    $region18: #{tpu_custom_call.1} parent=1 // pred_check
      _
    $region19: #{tpu_custom_call.1} parent=1 // pred_check_branch
      %41 = sbr.rel (0) target = $region21
    $region20: #{tpu_custom_call.1} parent=1 // pred_region
      %42 = dma.done [#allocation6], 4096
    $region21: #{tpu_custom_call.1} parent=1 // pred_fallthru
      _
    %v43 = vld [vmem:[#allocation2] sm:$0xff]
    %v44 = vld [vmem:[#allocation2 + $0x8] sm:$0xff]
    %v45 = vld [vmem:[#allocation2 + $0x10] sm:$0xff]
    %v46 = vld [vmem:[#allocation2 + $0x18] sm:$0xff]
    %v47 = vld [vmem:[#allocation5] sm:$0xff]
    %v48 = vld [vmem:[#allocation5 + $0x8] sm:$0xff]
    %v49 = vld [vmem:[#allocation5 + $0x10] sm:$0xff]
    %v50 = vld [vmem:[#allocation5 + $0x18] sm:$0xff]
    %v51 = vld [vmem:[#allocation5 + $0x20] sm:$0xff]
    %v52 = vld [vmem:[#allocation5 + $0x28] sm:$0xff]
    %v53 = vld [vmem:[#allocation5 + $0x30] sm:$0xff]
    %v54 = vld [vmem:[#allocation5 + $0x38] sm:$0xff]
    %v55 = vld [vmem:[#allocation5 + $0x40] sm:$0xff]
    %v56 = vld [vmem:[#allocation5 + $0x48] sm:$0xff]
    %v57 = vld [vmem:[#allocation5 + $0x50] sm:$0xff]
    %v58 = vld [vmem:[#allocation5 + $0x58] sm:$0xff]
    %v59 = vld [vmem:[#allocation5 + $0x60] sm:$0xff]
    %v60 = vld [vmem:[#allocation5 + $0x68] sm:$0xff]
    %v61 = vld [vmem:[#allocation5 + $0x70] sm:$0xff]
    %v62 = vld [vmem:[#allocation5 + $0x78] sm:$0xff]
    %v63 = vld [vmem:[#allocation5 + $0x80] sm:$0xff]
    %v64 = vld [vmem:[#allocation5 + $0x88] sm:$0xff]
    %v65 = vld [vmem:[#allocation5 + $0x90] sm:$0xff]
    %v66 = vld [vmem:[#allocation5 + $0x98] sm:$0xff]
    %v67 = vld [vmem:[#allocation5 + $0xa0] sm:$0xff]
    %v68 = vld [vmem:[#allocation5 + $0xa8] sm:$0xff]
    %v69 = vld [vmem:[#allocation5 + $0xb0] sm:$0xff]
    %v70 = vld [vmem:[#allocation5 + $0xb8] sm:$0xff]
    %v71 = vld [vmem:[#allocation5 + $0xc0] sm:$0xff]
    %v72 = vld [vmem:[#allocation5 + $0xc8] sm:$0xff]
    %v73 = vld [vmem:[#allocation5 + $0xd0] sm:$0xff]
    %v74 = vld [vmem:[#allocation5 + $0xd8] sm:$0xff]
    %v75 = vld [vmem:[#allocation5 + $0xe0] sm:$0xff]
    %v76 = vld [vmem:[#allocation5 + $0xe8] sm:$0xff]
    %v77 = vld [vmem:[#allocation5 + $0xf0] sm:$0xff]
    %v78 = vld [vmem:[#allocation5 + $0xf8] sm:$0xff]
    %v79 = vld [vmem:[%s2] sm:$0x1]
    %v81 = vlaneseq
    %v82 = vshrl.u32 %v81, 7
    %v83 = vsub.s32 0, %v82
    %v84 = vrot.slane %v79, %v83
    %86 = vmatprep.subr.mxu0 0.0
    %87 = vmatpush1.msra.mxu0 %v47
    %88 = vmatprep.subr.mxu0 0.0
    %89 = vmatpush1.msra.mxu0 %v48
    %90 = vmatprep.subr.mxu0 0.0
    %91 = vmatpush1.msra.mxu0 %v49
    %92 = vmatprep.subr.mxu0 0.0
    %93 = vmatpush1.msra.mxu0 %v50
    %94 = vmatprep.subr.mxu0 0.0
    %95 = vmatpush1.msra.mxu0 %v51
    %96 = vmatprep.subr.mxu0 0.0
    %97 = vmatpush1.msra.mxu0 %v52
    %98 = vmatprep.subr.mxu0 0.0
    %99 = vmatpush1.msra.mxu0 %v53
    %100 = vmatprep.subr.mxu0 0.0
    %101 = vmatpush1.msra.mxu0 %v54
    %102 = vmatprep.subr.mxu0 0.0
    %103 = vmatpush1.msra.mxu0 %v55
    %104 = vmatprep.subr.mxu0 0.0
    %105 = vmatpush1.msra.mxu0 %v56
    %106 = vmatprep.subr.mxu0 0.0
    %107 = vmatpush1.msra.mxu0 %v57
    %108 = vmatprep.subr.mxu0 0.0
    %109 = vmatpush1.msra.mxu0 %v58
    %110 = vmatprep.subr.mxu0 0.0
    %111 = vmatpush1.msra.mxu0 %v59
    %112 = vmatprep.subr.mxu0 0.0
    %113 = vmatpush1.msra.mxu0 %v60
    %114 = vmatprep.subr.mxu0 0.0
    %115 = vmatpush1.msra.mxu0 %v61
    %116 = vmatprep.subr.mxu0 0.0
    %117 = vmatpush1.msra.mxu0 %v62
    %118 = vmatprep.subr.mxu0 0.0
    %119 = vmatpush1.msra.mxu0 %v63
    %120 = vmatprep.subr.mxu0 0.0
    %121 = vmatpush1.msra.mxu0 %v64
    %122 = vmatprep.subr.mxu0 0.0
    %123 = vmatpush1.msra.mxu0 %v65
    %124 = vmatprep.subr.mxu0 0.0
    %125 = vmatpush1.msra.mxu0 %v66
    %126 = vmatprep.subr.mxu0 0.0
    %127 = vmatpush1.msra.mxu0 %v67
    %128 = vmatprep.subr.mxu0 0.0
    %129 = vmatpush1.msra.mxu0 %v68
    %130 = vmatprep.subr.mxu0 0.0
    %131 = vmatpush1.msra.mxu0 %v69
    %132 = vmatprep.subr.mxu0 0.0
    %133 = vmatpush1.msra.mxu0 %v70
    %134 = vmatprep.subr.mxu0 0.0
    %135 = vmatpush1.msra.mxu0 %v71
    %136 = vmatprep.subr.mxu0 0.0
    %137 = vmatpush1.msra.mxu0 %v72
    %138 = vmatprep.subr.mxu0 0.0
    %139 = vmatpush1.msra.mxu0 %v73
    %140 = vmatprep.subr.mxu0 0.0
    %141 = vmatpush1.msra.mxu0 %v74
    %142 = vmatprep.subr.mxu0 0.0
    %143 = vmatpush1.msra.mxu0 %v75
    %144 = vmatprep.subr.mxu0 0.0
    %145 = vmatpush1.msra.mxu0 %v76
    %146 = vmatprep.subr.mxu0 0.0
    %147 = vmatpush1.msra.mxu0 %v77
    %148 = vmatprep.subr.mxu0 0.0
    %149 = vmatpush1.msra.mxu0 %v78
    %150 = vmatprep.mubr.f32.mxu0 %v44
    %151 = vmatmul.mubr.f32.gmra.mrb[0].mxu0 %v43
    %v152 = vpop.f32.mrb[0].mxu0
    %v153 = vadd.f32 %v84, %v152
    %v154 = vpop.f32.mrb[0].mxu0
    %155 = vmatprep.mubr.f32.mxu0 %v46
    %156 = vmatmul.mubr.f32.gmra.mrb[0].mxu0 %v45
    %v157 = vpop.f32.mrb[0].mxu0
    %v158 = vadd.f32 %v84, %v157
    %v159 = vpop.f32.mrb[0].mxu0
    %160 = vdwg.mxu0
    %161 = vst [vmem:[#allocation7] sm:$0xff] %v153
    %162 = vst [vmem:[#allocation7 + $0x8] sm:$0xff] %v158
    // Predicated region
    $region22: #{tpu_custom_call.1} parent=1 // pred_check
      _
    $region23: #{tpu_custom_call.1} parent=1 // pred_check_branch
      %164 = sbr.rel (0) target = $region25
    $region24: #{tpu_custom_call.1} parent=1 // pred_region
      %s166 = ssub.s32 256, 256
      %167 = vsyncadd [#allocation4], %s166
      %s168 = sshll.u32 [#allocation7], 4
      %s169 = int_to_ptr.vmem [resolvable:$true] %s168
      %174 = dma.vmem_to_hbm [thread:$0]  %s169, 256, %s3, [#allocation4], 128, 128, 8
    $region25: #{tpu_custom_call.1} parent=1 // pred_fallthru
      _
    // Predicated region
    $region26: #{tpu_custom_call.1} parent=1 // pred_check
      _
    $region27: #{tpu_custom_call.1} parent=1 // pred_check_branch
      %176 = sbr.rel (0) target = $region29
    $region28: #{tpu_custom_call.1} parent=1 // pred_region
      %177 = dma.done [#allocation4], 256
    $region29: #{tpu_custom_call.1} parent=1 // pred_fallthru
      _
    %178 = vsyncpa [#allocation3], 1
    %179 = vsyncpa [#allocation6], 1
    %180 = vsyncpa [#allocation4], 1

</llo_original>
